<compile_context>
chip_gen: v5e
topology: v5e:2x2
jax: 0.10.0
libtpu: 0.0.40
codegen_flags: <defaults>
</compile_context>

<pallas_src>
import jax
import jax.numpy as jnp
from jax.experimental import pallas as pl
from jax.experimental.pallas import tpu as pltpu


def _copy_kernel(x_ref, o_ref):
    # Pure identity on the current VMEM tile.
    o_ref[...] = x_ref[...]


def _cdiv(a, b):
    return -(-a // b)


def _run_copy(x2, blk_r, cols, *, donate, vmem_limit_bytes):
    rows = x2.shape[0]
    grid = (_cdiv(rows, blk_r),)
    return pl.pallas_call(
        _copy_kernel,
        out_shape=jax.ShapeDtypeStruct(x2.shape, x2.dtype),
        grid=grid,
        in_specs=[pl.BlockSpec((blk_r, cols), lambda i: (i, 0))],
        out_specs=pl.BlockSpec((blk_r, cols), lambda i: (i, 0)),
        input_output_aliases=({0: 0} if donate else {}),
        compiler_params=pltpu.CompilerParams(
            dimension_semantics=("parallel",),
            vmem_limit_bytes=vmem_limit_bytes,
        ),
    )(x2)


def pallas_identity_copy(x, *, block_bytes=8 * 1024 * 1024,
                         vmem_limit_bytes=40 * 1024 * 1024,
                         donate=False):
    """Pallas identity copy (test/opt-in path).

    NOTE: production code should simply `return x` (see FeedForwardPallas);
    this exists to exercise the kernel path as cheaply as possible.
    """
    if x.size == 0:
        return x

    orig_shape = x.shape
    dtype = x.dtype
    itemsize = jnp.dtype(dtype).itemsize
    n_elems = x.size

    # Sublane packing multiple for the dtype (f32: 8, bf16: 16, int8/fp8: 32).
    if itemsize >= 4:
        sub = 8
    elif itemsize == 2:
        sub = 16
    else:
        sub = 32

    # --- choose a lane-dense 2D layout --------------------------------------
    lane = None
    for cand in (4096, 2048, 1024, 512, 256, 128):
        if n_elems % cand == 0:
            lane = cand
            break

    tail = 0
    if lane is None:
        if n_elems < 128:
            # Tiny array: single full-extent block (legal for non-128 widths).
            x2 = x.reshape(1, n_elems)
            out2 = _run_copy(x2, 1, n_elems, donate=donate,
                             vmem_limit_bytes=vmem_limit_bytes)
            return out2.reshape(orig_shape)
        # Lane-dense main slab + small tail handled outside the kernel
        # (avoids vst.msk partial stores on the bulk of the data).
        lane = 512 if n_elems >= 512 else 128
        main = (n_elems // lane) * lane
        tail = n_elems - main
        x_flat = x.reshape(-1)
        x2 = x_flat[:main].reshape(main // lane, lane)
    else:
        x_flat = None
        x2 = x.reshape(n_elems // lane, lane)

    rows, cols = x2.shape

    # --- block-row sizing: biggest dtype-aligned tile under `block_bytes` ----
    row_bytes = max(1, cols * itemsize)
    max_rows_by_bytes = max(1, block_bytes // row_bytes)
    if rows <= max(sub, max_rows_by_bytes):
        blk_r = rows                       # single block == full row extent
    else:
        blk_r = max(sub, (max_rows_by_bytes // sub) * sub)
        # Prefer a nearby exact divisor of rows (avoid a masked final tile).
        if rows % blk_r:
            lo = max(sub, blk_r - 64 * sub)
            for cand_r in range(blk_r, lo - 1, -sub):
                if rows % cand_r == 0:
                    blk_r = cand_r
                    break

    # Ensure >= 2 parallel grid steps when there is enough work, so v7x's two
    # TensorCores both participate (no effect on single-TC v5e/v6e).
    if _cdiv(rows, blk_r) < 2 and rows >= 2 * sub:
        half = (rows + 1) // 2
        blk_r = ((half + sub - 1) // sub) * sub

    out2 = _run_copy(x2, blk_r, cols, donate=donate,
                     vmem_limit_bytes=vmem_limit_bytes)

    if tail:
        out = jnp.concatenate([out2.reshape(-1), x_flat[-tail:]])
        return out.reshape(orig_shape)
    return out2.reshape(orig_shape)


class FeedForwardPallas:
    """Mirror of the PyTorch FeedForward module (net = nn.Identity())."""

    def __init__(self, dim, hidden_dim, image_size, patch_size, kernel_size,
                 dropout=0.0):
        # nn.Identity() has no parameters; constructor args are unused, exactly
        # as in the reference module.
        self.dim = dim
        self.hidden_dim = hidden_dim

    def __call__(self, x, *, use_kernel=False):
        if use_kernel:
            # Opt-in kernel path (testing / benchmarking only).
            return pallas_identity_copy(x)
        # Identity: zero HBM traffic — the correct production implementation.
        return x


if __name__ == "__main__":
    key = jax.random.PRNGKey(0)

    # Primary test: (batch, seq, dim) ViT-style activation, f32.
    B, N, D = 2, 8, 32
    x = jax.random.normal(key, (B, N, D), dtype=jnp.float32)
    ff = FeedForwardPallas(dim=D, hidden_dim=4 * D, image_size=16,
                           patch_size=4, kernel_size=3)

    # Module fast path (pure identity, no kernel).
    y_fast = jax.block_until_ready(ff(x))
    assert y_fast.shape == x.shape and y_fast.dtype == x.dtype
    assert bool(jnp.all(y_fast == x))

    # Kernel path — run the Pallas kernel once and verify.
    y = jax.block_until_ready(ff(x, use_kernel=True))
    assert y.shape == x.shape and y.dtype == x.dtype
    assert bool(jnp.all(y == x))

    # bf16 input (exercises packed sublane multiple).
    xb = jax.random.normal(jax.random.PRNGKey(1), (2, 8, 48),
                           dtype=jnp.bfloat16)
    yb = jax.block_until_ready(pallas_identity_copy(xb))
    assert yb.shape == xb.shape and yb.dtype == xb.dtype
    assert bool(jnp.all(yb == xb))

    # Awkward size not divisible by 128 (lane-dense slab + tail path).
    xo = jax.random.normal(jax.random.PRNGKey(2), (2, 7, 33),
                           dtype=jnp.float32)
    yo = jax.block_until_ready(pallas_identity_copy(xo))
    assert yo.shape == xo.shape and yo.dtype == xo.dtype
    assert bool(jnp.all(yo == xo))

    # Larger slab (exercises multi-block parallel grid).
    xl = jax.random.normal(jax.random.PRNGKey(3), (8, 128, 256),
                           dtype=jnp.float32)
    yl = jax.block_until_ready(pallas_identity_copy(xl))
    assert yl.shape == xl.shape and yl.dtype == xl.dtype
    assert bool(jnp.all(yl == xl))

    print("KERNEL_OK")
</pallas_src>

<mosaic_0001>
module attributes {stable_mosaic.version = 11 : i64} {
  func.func @_copy_kernel(%arg0: i32, %arg1: memref<1x512xf32, #tpu.memory_space<vmem>>, %arg2: memref<1x512xf32, #tpu.memory_space<vmem>>) attributes {dimension_semantics = [#tpu.dimension_semantics<parallel>], iteration_bounds = array<i64: 1>, scalar_prefetch = 0 : i64, scratch_operands = 0 : i64, tpu.core_type = #tpu.core_type<tc>, window_params = [{transform_indices = @transform_0, window_bounds = array<i64: 1, 512>}, {transform_indices = @transform_1, window_bounds = array<i64: 1, 512>}]} {
    %c0 = arith.constant 0 : index
    %c0_0 = arith.constant 0 : index
    %0 = vector.load %arg1[%c0, %c0_0] : memref<1x512xf32, #tpu.memory_space<vmem>>, vector<1x512xf32>
    %c0_1 = arith.constant 0 : index
    %c0_2 = arith.constant 0 : index
    %1 = vector.load %arg2[%c0_1, %c0_2] : memref<1x512xf32, #tpu.memory_space<vmem>>, vector<1x512xf32>
    tpu.vector_store %arg2[%c0_1, %c0_2], %0 {strides = array<i32>} : memref<1x512xf32, #tpu.memory_space<vmem>>, vector<1x512xf32>,
    return
  }
  func.func @transform_0(%arg0: i32) -> (i32, i32) {
    %c0_i32 = arith.constant 0 : i32
    %c0_i32_0 = arith.constant 0 : i32
    return %arg0, %c0_i32 : i32, i32
  }
  func.func @transform_1(%arg0: i32) -> (i32, i32) {
    %c0_i32 = arith.constant 0 : i32
    %c0_i32_0 = arith.constant 0 : i32
    return %arg0, %c0_i32 : i32, i32
  }
}

</mosaic_0001>

<llo_original>
// kernel: tpu_custom_call.1
$region0: #{tpu_custom_call.1}
  #allocation0 [shape = 'u32[]', space=smem, size = 0x4, offset = 0x4, fixed_abs, tag = 'smem constant byte address 0x4 - core index']
  #allocation1 [shape = 'u32[72,128]{1,0:T(1,128)}', space=vmem, size = 0x9000, scoped, tag = 'internal scratch']
  %s0 = inlined_call_operand.hbm [shape: f32[1,512], index: 0, kind: input, shape index: {}]
  %s1 = inlined_call_operand.hbm [shape: f32[1,512], index: 1, kind: output, shape index: {}]
  %s2 = sld [smem:[#allocation0]]
  $region18: #{tpu_custom_call.1} parent=0
    _
  %s4 = ssub.s32 1, %s2
  %s5 = scalar_select 0, %s4, %s2
  $region1: #{tpu_custom_call.1} parent=0
    #allocation2 [shape = 'u8[2048]{0}', space=vmem, size = 0x800, scoped, tag = 'input window, operand 0, single buffered']
    #allocation3 [shape = 's32[1]{0}', space=sflag, size = 0x4, scoped, tag = 'scoped memory for tpu_custom_call.1']
    #allocation4 [shape = 's32[1]{0}', space=sflag, size = 0x4, scoped, tag = 'scoped memory for tpu_custom_call.1']
    #allocation5 [shape = 'u8[2048]{0}', space=vmem, size = 0x800, scoped, tag = 'output window, operand 0, single buffered']
    %6 = vsyncpa [#allocation3], 0
    %7 = vsyncpa [#allocation4], 0
    // Predicated region
    $region2: #{tpu_custom_call.1} parent=1 // pred_check
      _
    $region3: #{tpu_custom_call.1} parent=1 // pred_check_branch
      %9 = sbr.rel (0) target = $region5
    $region4: #{tpu_custom_call.1} parent=1 // pred_region
      %11 = vsyncadd [#allocation3], 0
      %s13 = sshll.u32 %s0, 4
      %s14 = int_to_ptr.hbm [resolvable:$true] %s13
      %s15 = sshll.u32 [#allocation2], 4
      %s16 = int_to_ptr.vmem [resolvable:$true] %s15
      %18 = dma.hbm_to_vmem [thread:$0]  %s14, 64, %s16, [#allocation3]
    $region5: #{tpu_custom_call.1} parent=1 // pred_fallthru
      _
    // Predicated region
    $region6: #{tpu_custom_call.1} parent=1 // pred_check
      _
    $region7: #{tpu_custom_call.1} parent=1 // pred_check_branch
      %20 = sbr.rel (0) target = $region9
    $region8: #{tpu_custom_call.1} parent=1 // pred_region
      %22 = dma.done [#allocation3], 64
    $region9: #{tpu_custom_call.1} parent=1 // pred_fallthru
      _
    %v23 = vld [vmem:[#allocation2] sm:$0xf]
    %v24 = vlaneseq
    %vm25 = vcmp.ge.s32.totalorder %v24, 0
    %vm26 = vcmp.lt.s32.totalorder %v24, 512
    %vm27 = vmand %vm25, %vm26
    %28 = vst.msk [vmem:[#allocation5] sm:$0xf] %vm27, %v23
    // Predicated region
    $region10: #{tpu_custom_call.1} parent=1 // pred_check
      _
    $region11: #{tpu_custom_call.1} parent=1 // pred_check_branch
      %30 = sbr.rel (0) target = $region13
    $region12: #{tpu_custom_call.1} parent=1 // pred_region
      %32 = vsyncadd [#allocation4], 0
      %s34 = sshll.u32 [#allocation5], 4
      %s35 = int_to_ptr.vmem [resolvable:$true] %s34
      %s36 = sshll.u32 %s1, 4
      %s37 = int_to_ptr.hbm [resolvable:$true] %s36
      %39 = dma.vmem_to_hbm [thread:$0]  %s35, 64, %s37, [#allocation4]
    $region13: #{tpu_custom_call.1} parent=1 // pred_fallthru
      _
    // Predicated region
    $region14: #{tpu_custom_call.1} parent=1 // pred_check
      _
    $region15: #{tpu_custom_call.1} parent=1 // pred_check_branch
      %41 = sbr.rel (0) target = $region17
    $region16: #{tpu_custom_call.1} parent=1 // pred_region
      %43 = dma.done [#allocation4], 64
    $region17: #{tpu_custom_call.1} parent=1 // pred_fallthru
      _
    %44 = vsyncpa [#allocation3], 1
    %45 = vsyncpa [#allocation4], 1

</llo_original>
